<compile_context>
chip_gen: v5e
topology: v5e:2x2
jax: 0.10.0
libtpu: 0.0.40
codegen_flags: <defaults>
</compile_context>

<pallas_src>
import functools

import jax
import jax.numpy as jnp
from jax.experimental import pallas as pl
from jax.experimental.pallas import tpu as pltpu

# Module constants (from the PyTorch source)
EMBEDDING_DIM = 64 * 2      # 128
HIDDEN_SIZE = 64
INPUT_SIZE = EMBEDDING_DIM
TIME_STEP = 10
VOCAB_SIZE = 100            # synthetic vocab (label-encoder output size is data-dependent)

LANE = 128                                               # padded hidden width (full vreg lane width)
SUBLANE = 8
VOCAB_PAD = ((VOCAB_SIZE + LANE - 1) // LANE) * LANE     # MXU-friendly contraction dim (128)


def _rnn_kernel(ids_ref, table_ref, whh_ref, wout_ref, bout_ref, o_ref, *,
                time_steps, batch):
    """Whole forward (gather + input proj + recurrence + head) in one invocation.

    ids_ref  : (T*Bp, 1)        int32  time-major token ids (row t*Bp + b == step t, sample b)
    table_ref: (VOCAB_PAD, LANE) f32   pre-projected table: emb @ W_ih^T + (b_ih+b_hh), zero lanes >= H
    whh_ref  : (LANE, LANE)      f32   W_hh^T zero-padded (top-left H x H block is real)
    wout_ref : (1, LANE)         f32   W_out row, zero lanes >= H
    bout_ref : (1, 1)            f32   b_out (SMEM scalar)
    o_ref    : (Bp, LANE)        f32   sigmoid(logit) broadcast across lanes (lane-dense store)
    """
    tb = time_steps * batch

    # In-kernel embedding gather fused with the (pre-folded) input projection:
    #   one_hot(ids) @ xw_table  ==  (emb @ W_ih^T + b_ih + b_hh)[ids]
    # One well-shaped MXU call for all timesteps; no HBM gather, no x_flat round trip.
    ids = ids_ref[...]                                                   # (T*Bp, 1) int32
    vocab_iota = jax.lax.broadcasted_iota(jnp.int32, (tb, VOCAB_PAD), 1)
    one_hot = (vocab_iota == ids).astype(jnp.float32)                    # (T*Bp, VOCAB_PAD)
    xw = jnp.dot(one_hot, table_ref[...],
                 preferred_element_type=jnp.float32)                     # (T*Bp, LANE)

    # Recurrence: statically unrolled; h is one f32 vreg row-block (Bp x 128).
    # Padded lanes stay exactly 0 (zero W_hh columns, zero xw lanes, tanh(0)=0).
    whh = whh_ref[...]
    h = jnp.zeros((batch, LANE), jnp.float32)
    for t in range(time_steps):
        xw_t = xw[t * batch:(t + 1) * batch, :]          # sublane-aligned static slice
        h = jnp.tanh(jnp.dot(h, whh, preferred_element_type=jnp.float32) + xw_t)

    # Head: Linear(H, 1) as VPU multiply + XLU lane reduce (no 128x128 MXU epilogue),
    # then sigmoid via a single EUP tanh. Output kept lane-dense; wrapper slices lane 0.
    logit = jnp.sum(h * wout_ref[...], axis=-1, keepdims=True) + bout_ref[0, 0]   # (Bp, 1)
    sig = 0.5 * jnp.tanh(0.5 * logit) + 0.5
    o_ref[...] = jnp.broadcast_to(sig, (batch, LANE))


def prepare_params(params):
    """ONE-TIME parameter preparation (run once at model-load time, not per call).

    Folds the embedding through the input projection and pre-pads/transposes all
    weights into lane-dense f32 layouts so rnn_forward does no per-call glue.
    """
    emb, w_ih, w_hh, b_ih, b_hh, w_out, b_out = (
        params["emb"], params["w_ih"], params["w_hh"],
        params["b_ih"], params["b_hh"], params["w_out"], params["b_out"],
    )
    V, _ = emb.shape
    H = w_ih.shape[0]

    # xw_table[v] = emb[v] @ W_ih^T + (b_ih + b_hh); zero lanes >= H, zero rows >= V.
    proj = emb.astype(jnp.float32) @ w_ih.T.astype(jnp.float32) + (b_ih + b_hh)   # (V, H)
    xw_table = jnp.zeros((VOCAB_PAD, LANE), jnp.float32).at[:V, :H].set(proj)

    whh_pad = jnp.zeros((LANE, LANE), jnp.float32).at[:H, :H].set(w_hh.T)
    wout_row = jnp.zeros((1, LANE), jnp.float32).at[0, :H].set(w_out[0])
    bout = jnp.asarray(b_out, jnp.float32).reshape(1, 1)

    return {"xw_table": xw_table, "whh": whh_pad, "wout": wout_row, "bout": bout}


def _rnn_forward(token_ids, prepped):
    """token_ids: (B, T) int. Returns (B, 1) float32 == sigmoid(Linear(h_T))."""
    B, T = token_ids.shape
    Bp = ((B + SUBLANE - 1) // SUBLANE) * SUBLANE   # keep per-step slices on vreg boundaries
    ids = token_ids.astype(jnp.int32)
    if Bp != B:
        ids = jnp.pad(ids, ((0, Bp - B), (0, 0)))   # dummy rows use id 0; sliced off below
    ids_tm = ids.T.reshape(T * Bp, 1)               # time-major flat ids (tiny int transpose)

    vmem = pl.BlockSpec(memory_space=pltpu.MemorySpace.VMEM)
    smem = pl.BlockSpec(memory_space=pltpu.MemorySpace.SMEM)

    out = pl.pallas_call(
        functools.partial(_rnn_kernel, time_steps=T, batch=Bp),
        out_shape=jax.ShapeDtypeStruct((Bp, LANE), jnp.float32),
        in_specs=[vmem, vmem, vmem, vmem, smem],
        out_specs=vmem,
    )(ids_tm, prepped["xw_table"], prepped["whh"], prepped["wout"], prepped["bout"])

    return out[:B, :1]   # lane 0 holds sigmoid(h_T @ W_out^T + b_out)


rnn_forward = jax.jit(_rnn_forward)


def init_params(key):
    """Deterministic synthetic parameter init matching the nn.Module shapes."""
    ks = jax.random.split(key, 7)
    k_rnn = 1.0 / jnp.sqrt(HIDDEN_SIZE)
    k_out = 1.0 / jnp.sqrt(HIDDEN_SIZE)
    return {
        "emb": jax.random.normal(ks[0], (VOCAB_SIZE, EMBEDDING_DIM), jnp.float32),
        "w_ih": jax.random.uniform(ks[1], (HIDDEN_SIZE, INPUT_SIZE), jnp.float32, -k_rnn, k_rnn),
        "w_hh": jax.random.uniform(ks[2], (HIDDEN_SIZE, HIDDEN_SIZE), jnp.float32, -k_rnn, k_rnn),
        "b_ih": jax.random.uniform(ks[3], (HIDDEN_SIZE,), jnp.float32, -k_rnn, k_rnn),
        "b_hh": jax.random.uniform(ks[4], (HIDDEN_SIZE,), jnp.float32, -k_rnn, k_rnn),
        "w_out": jax.random.uniform(ks[5], (1, HIDDEN_SIZE), jnp.float32, -k_out, k_out),
        "b_out": jax.random.uniform(ks[6], (1,), jnp.float32, -k_out, k_out),
    }


def reference_forward(token_ids, params):
    """Pure-JAX reference mirroring the PyTorch forward (for a sanity check)."""
    B, T = token_ids.shape
    x = jnp.take(params["emb"], token_ids.reshape(-1), axis=0).reshape(B, T, EMBEDDING_DIM)
    h = jnp.zeros((B, HIDDEN_SIZE), jnp.float32)
    for t in range(T):
        h = jnp.tanh(
            x[:, t, :] @ params["w_ih"].T + params["b_ih"]
            + h @ params["w_hh"].T + params["b_hh"]
        )
    logits = h @ params["w_out"].T + params["b_out"]
    return jax.nn.sigmoid(logits)


if __name__ == "__main__":
    key = jax.random.PRNGKey(0)
    k_param, k_ids = jax.random.split(key)

    B = 8
    params = init_params(k_param)
    prepped = prepare_params(params)        # one-time prep (not part of the per-call path)
    token_ids = jax.random.randint(k_ids, (B, TIME_STEP), 0, VOCAB_SIZE, dtype=jnp.int32)

    out = rnn_forward(token_ids, prepped)
    out = jax.block_until_ready(out)

    ref = reference_forward(token_ids, params)
    assert out.shape == (B, 1)
    assert jnp.allclose(out, ref, atol=1e-5, rtol=1e-5), (out, ref)

    print("KERNEL_OK")
</pallas_src>

<mosaic_0001>
module attributes {stable_mosaic.version = 11 : i64} {
  func.func @_rnn_kernel(%arg0: memref<80x1xi32, #tpu.memory_space<vmem>>, %arg1: memref<128x128xf32, #tpu.memory_space<vmem>>, %arg2: memref<128x128xf32, #tpu.memory_space<vmem>>, %arg3: memref<1x128xf32, #tpu.memory_space<vmem>>, %arg4: memref<1x1xf32, #tpu.memory_space<smem>>, %arg5: memref<8x128xf32, #tpu.memory_space<vmem>>) attributes {dimension_semantics = [], scalar_prefetch = 0 : i64, scratch_operands = 0 : i64, tpu.core_type = #tpu.core_type<tc>} {
    %c0 = arith.constant 0 : index
    %c0_0 = arith.constant 0 : index
    %0 = vector.load %arg0[%c0, %c0_0] : memref<80x1xi32, #tpu.memory_space<vmem>>, vector<80x1xi32>
    %1 = tpu.iota {dimensions = array<i32: 1>} : vector<80x128xi32>
    %2 = vector.broadcast %0 : vector<80x1xi32> to vector<80x128xi32>
    %3 = arith.cmpi eq, %1, %2 : vector<80x128xi32>
    %4 = arith.extui %3 : vector<80x128xi1> to vector<80x128xi32>
    %5 = arith.sitofp %4 : vector<80x128xi32> to vector<80x128xf32>
    %c0_1 = arith.constant 0 : index
    %c0_2 = arith.constant 0 : index
    %6 = vector.load %arg1[%c0_1, %c0_2] : memref<128x128xf32, #tpu.memory_space<vmem>>, vector<128x128xf32>
    %cst = arith.constant dense<0.000000e+00> : vector<80x128xf32>
    %7 = tpu.matmul %5, %6, %cst {dimension_numbers = #tpu.dot_dimension_numbers<[1], [0], [0], [1], [0, 0, 1, 1], [], []>} : vector<80x128xf32>, vector<128x128xf32>, vector<80x128xf32> -> vector<80x128xf32>
    %c0_3 = arith.constant 0 : index
    %c0_4 = arith.constant 0 : index
    %8 = vector.load %arg2[%c0_3, %c0_4] : memref<128x128xf32, #tpu.memory_space<vmem>>, vector<128x128xf32>
    %cst_5 = arith.constant 0.000000e+00 : f32
    %9 = vector.broadcast %cst_5 : f32 to vector<8x128xf32>
    %10 = vector.extract_strided_slice %7 {offsets = [0, 0], sizes = [8, 128], strides = [1, 1]} : vector<80x128xf32> to vector<8x128xf32>
    %cst_6 = arith.constant dense<0.000000e+00> : vector<8x128xf32>
    %11 = tpu.matmul %9, %8, %cst_6 {dimension_numbers = #tpu.dot_dimension_numbers<[1], [0], [0], [1], [0, 0, 1, 1], [], []>} : vector<8x128xf32>, vector<128x128xf32>, vector<8x128xf32> -> vector<8x128xf32>
    %12 = arith.addf %11, %10 : vector<8x128xf32>
    %13 = math.tanh %12 : vector<8x128xf32>
    %14 = vector.extract_strided_slice %7 {offsets = [8, 0], sizes = [8, 128], strides = [1, 1]} : vector<80x128xf32> to vector<8x128xf32>
    %cst_7 = arith.constant dense<0.000000e+00> : vector<8x128xf32>
    %15 = tpu.matmul %13, %8, %cst_7 {dimension_numbers = #tpu.dot_dimension_numbers<[1], [0], [0], [1], [0, 0, 1, 1], [], []>} : vector<8x128xf32>, vector<128x128xf32>, vector<8x128xf32> -> vector<8x128xf32>
    %16 = arith.addf %15, %14 : vector<8x128xf32>
    %17 = math.tanh %16 : vector<8x128xf32>
    %18 = vector.extract_strided_slice %7 {offsets = [16, 0], sizes = [8, 128], strides = [1, 1]} : vector<80x128xf32> to vector<8x128xf32>
    %cst_8 = arith.constant dense<0.000000e+00> : vector<8x128xf32>
    %19 = tpu.matmul %17, %8, %cst_8 {dimension_numbers = #tpu.dot_dimension_numbers<[1], [0], [0], [1], [0, 0, 1, 1], [], []>} : vector<8x128xf32>, vector<128x128xf32>, vector<8x128xf32> -> vector<8x128xf32>
    %20 = arith.addf %19, %18 : vector<8x128xf32>
    %21 = math.tanh %20 : vector<8x128xf32>
    %22 = vector.extract_strided_slice %7 {offsets = [24, 0], sizes = [8, 128], strides = [1, 1]} : vector<80x128xf32> to vector<8x128xf32>
    %cst_9 = arith.constant dense<0.000000e+00> : vector<8x128xf32>
    %23 = tpu.matmul %21, %8, %cst_9 {dimension_numbers = #tpu.dot_dimension_numbers<[1], [0], [0], [1], [0, 0, 1, 1], [], []>} : vector<8x128xf32>, vector<128x128xf32>, vector<8x128xf32> -> vector<8x128xf32>
    %24 = arith.addf %23, %22 : vector<8x128xf32>
    %25 = math.tanh %24 : vector<8x128xf32>
    %26 = vector.extract_strided_slice %7 {offsets = [32, 0], sizes = [8, 128], strides = [1, 1]} : vector<80x128xf32> to vector<8x128xf32>
    %cst_10 = arith.constant dense<0.000000e+00> : vector<8x128xf32>
    %27 = tpu.matmul %25, %8, %cst_10 {dimension_numbers = #tpu.dot_dimension_numbers<[1], [0], [0], [1], [0, 0, 1, 1], [], []>} : vector<8x128xf32>, vector<128x128xf32>, vector<8x128xf32> -> vector<8x128xf32>
    %28 = arith.addf %27, %26 : vector<8x128xf32>
    %29 = math.tanh %28 : vector<8x128xf32>
    %30 = vector.extract_strided_slice %7 {offsets = [40, 0], sizes = [8, 128], strides = [1, 1]} : vector<80x128xf32> to vector<8x128xf32>
    %cst_11 = arith.constant dense<0.000000e+00> : vector<8x128xf32>
    %31 = tpu.matmul %29, %8, %cst_11 {dimension_numbers = #tpu.dot_dimension_numbers<[1], [0], [0], [1], [0, 0, 1, 1], [], []>} : vector<8x128xf32>, vector<128x128xf32>, vector<8x128xf32> -> vector<8x128xf32>
    %32 = arith.addf %31, %30 : vector<8x128xf32>
    %33 = math.tanh %32 : vector<8x128xf32>
    %34 = vector.extract_strided_slice %7 {offsets = [48, 0], sizes = [8, 128], strides = [1, 1]} : vector<80x128xf32> to vector<8x128xf32>
    %cst_12 = arith.constant dense<0.000000e+00> : vector<8x128xf32>
    %35 = tpu.matmul %33, %8, %cst_12 {dimension_numbers = #tpu.dot_dimension_numbers<[1], [0], [0], [1], [0, 0, 1, 1], [], []>} : vector<8x128xf32>, vector<128x128xf32>, vector<8x128xf32> -> vector<8x128xf32>
    %36 = arith.addf %35, %34 : vector<8x128xf32>
    %37 = math.tanh %36 : vector<8x128xf32>
    %38 = vector.extract_strided_slice %7 {offsets = [56, 0], sizes = [8, 128], strides = [1, 1]} : vector<80x128xf32> to vector<8x128xf32>
    %cst_13 = arith.constant dense<0.000000e+00> : vector<8x128xf32>
    %39 = tpu.matmul %37, %8, %cst_13 {dimension_numbers = #tpu.dot_dimension_numbers<[1], [0], [0], [1], [0, 0, 1, 1], [], []>} : vector<8x128xf32>, vector<128x128xf32>, vector<8x128xf32> -> vector<8x128xf32>
    %40 = arith.addf %39, %38 : vector<8x128xf32>
    %41 = math.tanh %40 : vector<8x128xf32>
    %42 = vector.extract_strided_slice %7 {offsets = [64, 0], sizes = [8, 128], strides = [1, 1]} : vector<80x128xf32> to vector<8x128xf32>
    %cst_14 = arith.constant dense<0.000000e+00> : vector<8x128xf32>
    %43 = tpu.matmul %41, %8, %cst_14 {dimension_numbers = #tpu.dot_dimension_numbers<[1], [0], [0], [1], [0, 0, 1, 1], [], []>} : vector<8x128xf32>, vector<128x128xf32>, vector<8x128xf32> -> vector<8x128xf32>
    %44 = arith.addf %43, %42 : vector<8x128xf32>
    %45 = math.tanh %44 : vector<8x128xf32>
    %46 = vector.extract_strided_slice %7 {offsets = [72, 0], sizes = [8, 128], strides = [1, 1]} : vector<80x128xf32> to vector<8x128xf32>
    %cst_15 = arith.constant dense<0.000000e+00> : vector<8x128xf32>
    %47 = tpu.matmul %45, %8, %cst_15 {dimension_numbers = #tpu.dot_dimension_numbers<[1], [0], [0], [1], [0, 0, 1, 1], [], []>} : vector<8x128xf32>, vector<128x128xf32>, vector<8x128xf32> -> vector<8x128xf32>
    %48 = arith.addf %47, %46 : vector<8x128xf32>
    %49 = math.tanh %48 : vector<8x128xf32>
    %c0_16 = arith.constant 0 : index
    %c0_17 = arith.constant 0 : index
    %50 = vector.load %arg3[%c0_16, %c0_17] : memref<1x128xf32, #tpu.memory_space<vmem>>, vector<1x128xf32>
    %51 = vector.broadcast %50 : vector<1x128xf32> to vector<8x128xf32>
    %52 = arith.mulf %49, %51 : vector<8x128xf32>
    %cst_18 = arith.constant dense<0.000000e+00> : vector<8xf32>
    %53 = vector.multi_reduction <add>, %52, %cst_18 [1] : vector<8x128xf32> to vector<8xf32>
    %54 = vector.shape_cast %53 : vector<8xf32> to vector<8x1xf32>
    %c0_19 = arith.constant 0 : index
    %c0_20 = arith.constant 0 : index
    %55 = memref.load %arg4[%c0_19, %c0_20] : memref<1x1xf32, #tpu.memory_space<smem>>
    %56 = vector.broadcast %55 : f32 to vector<8x1xf32>
    %57 = arith.addf %54, %56 : vector<8x1xf32>
    %cst_21 = arith.constant 5.000000e-01 : f32
    %58 = vector.broadcast %cst_21 : f32 to vector<8x1xf32>
    %59 = arith.mulf %58, %57 : vector<8x1xf32>
    %60 = math.tanh %59 : vector<8x1xf32>
    %cst_22 = arith.constant 5.000000e-01 : f32
    %61 = vector.broadcast %cst_22 : f32 to vector<8x1xf32>
    %62 = arith.mulf %61, %60 : vector<8x1xf32>
    %cst_23 = arith.constant 5.000000e-01 : f32
    %63 = vector.broadcast %cst_23 : f32 to vector<8x1xf32>
    %64 = arith.addf %62, %63 : vector<8x1xf32>
    %65 = vector.shape_cast %64 : vector<8x1xf32> to vector<8x1xf32>
    %66 = vector.broadcast %65 : vector<8x1xf32> to vector<8x128xf32>
    %c0_24 = arith.constant 0 : index
    %c0_25 = arith.constant 0 : index
    %67 = vector.load %arg5[%c0_24, %c0_25] : memref<8x128xf32, #tpu.memory_space<vmem>>, vector<8x128xf32>
    tpu.vector_store %arg5[%c0_24, %c0_25], %66 {strides = array<i32>} : memref<8x128xf32, #tpu.memory_space<vmem>>, vector<8x128xf32>,
    return
  }
}

</mosaic_0001>

<llo_original>
// kernel: _rnn_forward.1
$region0: #{_rnn_forward.1}
  #allocation0 [shape = 'u32[]', space=smem, size = 0x4, offset = 0x4, fixed_abs, tag = 'smem constant byte address 0x4 - core index']
  #allocation1 [shape = 'u32[72,128]{1,0:T(1,128)}', space=vmem, size = 0x9000, scoped, tag = 'internal scratch']
  #allocation2 [shape = 'f32[1,1]{1,0:T(1,128)S(6)}', space=smem, size = 0x200, scoped, tag = 'scoped memory for _rnn_forward.1']
  %s0 = inlined_call_operand.vmem [shape: s32[80,1], index: 0, kind: input, shape index: {}]
  %s1 = inlined_call_operand.hbm [shape: f32[128,128], index: 1, kind: input, shape index: {}]
  %s2 = inlined_call_operand.hbm [shape: f32[128,128], index: 2, kind: input, shape index: {}]
  %s3 = inlined_call_operand.vmem [shape: f32[1,128], index: 3, kind: input, shape index: {}]
  %s4 = inlined_call_operand.<no memory space> [shape: f32[1,1], index: 4, kind: input, shape index: {}]
  %s5 = inlined_call_operand.vmem [shape: f32[8,128], index: 5, kind: output, shape index: {}]
  %s6 = sld [smem:[#allocation0]]
  $region38: #{_rnn_forward.1} parent=0
    _
  %s8 = ssub.s32 1, %s6
  %s9 = scalar_select 0, %s8, %s6
  %10 = sst [smem:[#allocation2]] %s4
  $region1: #{_rnn_forward.1} parent=0
    #allocation3 [shape = 'u8[65536]{0}', space=vmem, size = 0x10000, scoped, tag = 'input window, operand 1, single buffered']
    #allocation4 [shape = 's32[1]{0}', space=sflag, size = 0x4, scoped, tag = 'scoped memory for _rnn_forward.1']
    #allocation5 [shape = 'u8[65536]{0}', space=vmem, size = 0x10000, scoped, tag = 'input window, operand 2, single buffered']
    #allocation6 [shape = 's32[1]{0}', space=sflag, size = 0x4, scoped, tag = 'scoped memory for _rnn_forward.1']
    %11 = vsyncpa [#allocation4], 0
    %12 = vsyncpa [#allocation6], 0
    // Predicated region
    $region2: #{_rnn_forward.1} parent=1 // pred_check
      _
    $region3: #{_rnn_forward.1} parent=1 // pred_check_branch
      %14 = sbr.rel (0) target = $region5
    $region4: #{_rnn_forward.1} parent=1 // pred_region
      _
    $region5: #{_rnn_forward.1} parent=1 // pred_fallthru
      _
    // Predicated region
    $region6: #{_rnn_forward.1} parent=1 // pred_check
      _
    $region7: #{_rnn_forward.1} parent=1 // pred_check_branch
      %16 = sbr.rel (0) target = $region9
    $region8: #{_rnn_forward.1} parent=1 // pred_region
      %18 = vsyncadd [#allocation4], 0
      %s19 = sshll.u32 %s1, 4
      %s20 = int_to_ptr.hbm [resolvable:$true] %s19
      %s21 = sshll.u32 [#allocation3], 4
      %s22 = int_to_ptr.vmem [resolvable:$true] %s21
      %27 = dma.hbm_to_vmem [thread:$0]  %s20, 2048, %s22, [#allocation4], 128, 128, 8
    $region9: #{_rnn_forward.1} parent=1 // pred_fallthru
      _
    // Predicated region
    $region10: #{_rnn_forward.1} parent=1 // pred_check
      _
    $region11: #{_rnn_forward.1} parent=1 // pred_check_branch
      %29 = sbr.rel (0) target = $region13
    $region12: #{_rnn_forward.1} parent=1 // pred_region
      %31 = vsyncadd [#allocation6], 0
      %s32 = sshll.u32 %s2, 4
      %s33 = int_to_ptr.hbm [resolvable:$true] %s32
      %s34 = sshll.u32 [#allocation5], 4
      %s35 = int_to_ptr.vmem [resolvable:$true] %s34
      %40 = dma.hbm_to_vmem [thread:$0]  %s33, 2048, %s35, [#allocation6], 128, 128, 8
    $region13: #{_rnn_forward.1} parent=1 // pred_fallthru
      _
    // Predicated region
    $region14: #{_rnn_forward.1} parent=1 // pred_check
      _
    $region15: #{_rnn_forward.1} parent=1 // pred_check_branch
      %42 = sbr.rel (0) target = $region17
    $region16: #{_rnn_forward.1} parent=1 // pred_region
      _
    $region17: #{_rnn_forward.1} parent=1 // pred_fallthru
      _
    // Predicated region
    $region18: #{_rnn_forward.1} parent=1 // pred_check
      _
    $region19: #{_rnn_forward.1} parent=1 // pred_check_branch
      %44 = sbr.rel (0) target = $region21
    $region20: #{_rnn_forward.1} parent=1 // pred_region
      _
    $region21: #{_rnn_forward.1} parent=1 // pred_fallthru
      _
    // Predicated region
    $region22: #{_rnn_forward.1} parent=1 // pred_check
      _
    $region23: #{_rnn_forward.1} parent=1 // pred_check_branch
      %46 = sbr.rel (0) target = $region25
    $region24: #{_rnn_forward.1} parent=1 // pred_region
      %48 = dma.done [#allocation4], 2048
    $region25: #{_rnn_forward.1} parent=1 // pred_fallthru
      _
    // Predicated region
    $region26: #{_rnn_forward.1} parent=1 // pred_check
      _
    $region27: #{_rnn_forward.1} parent=1 // pred_check_branch
      %50 = sbr.rel (0) target = $region29
    $region28: #{_rnn_forward.1} parent=1 // pred_region
      %52 = dma.done [#allocation6], 2048
    $region29: #{_rnn_forward.1} parent=1 // pred_fallthru
      _
    %v53 = vld [vmem:[%s0] sm:$0xff]
    %v54 = vld [vmem:[%s0 + $0x8] sm:$0xff]
    %v55 = vld [vmem:[%s0 + $0x10] sm:$0xff]
    %v56 = vld [vmem:[%s0 + $0x18] sm:$0xff]
    %v57 = vld [vmem:[%s0 + $0x20] sm:$0xff]
    %v58 = vld [vmem:[%s0 + $0x28] sm:$0xff]
    %v59 = vld [vmem:[%s0 + $0x30] sm:$0xff]
    %v60 = vld [vmem:[%s0 + $0x38] sm:$0xff]
    %v61 = vld [vmem:[%s0 + $0x40] sm:$0xff]
    %v62 = vld [vmem:[%s0 + $0x48] sm:$0xff]
    %v63 = vlaneseq
    %v64 = vand.u32 %v63, 127
    %65 = vset.pattern.permute.xlu0 0
    %66 = vperm.xlu0 %65, %v53
    %v67 = vpop.permute.xlu0 %66
    %68 = vset.pattern.permute.xlu0 0
    %69 = vperm.xlu0 %68, %v54
    %v70 = vpop.permute.xlu0 %69
    %71 = vset.pattern.permute.xlu0 0
    %72 = vperm.xlu0 %71, %v55
    %v73 = vpop.permute.xlu0 %72
    %74 = vset.pattern.permute.xlu0 0
    %75 = vperm.xlu0 %74, %v56
    %v76 = vpop.permute.xlu0 %75
    %77 = vset.pattern.permute.xlu0 0
    %78 = vperm.xlu0 %77, %v57
    %v79 = vpop.permute.xlu0 %78
    %80 = vset.pattern.permute.xlu0 0
    %81 = vperm.xlu0 %80, %v58
    %v82 = vpop.permute.xlu0 %81
    %83 = vset.pattern.permute.xlu0 0
    %84 = vperm.xlu0 %83, %v59
    %v85 = vpop.permute.xlu0 %84
    %86 = vset.pattern.permute.xlu0 0
    %87 = vperm.xlu0 %86, %v60
    %v88 = vpop.permute.xlu0 %87
    %89 = vset.pattern.permute.xlu0 0
    %90 = vperm.xlu0 %89, %v61
    %v91 = vpop.permute.xlu0 %90
    %92 = vset.pattern.permute.xlu0 0
    %93 = vperm.xlu0 %92, %v62
    %v94 = vpop.permute.xlu0 %93
    %vm95 = vcmp.eq.s32.totalorder %v64, %v67
    %vm96 = vcmp.eq.s32.totalorder %v64, %v70
    %vm97 = vcmp.eq.s32.totalorder %v64, %v73
    %vm98 = vcmp.eq.s32.totalorder %v64, %v76
    %vm99 = vcmp.eq.s32.totalorder %v64, %v79
    %vm100 = vcmp.eq.s32.totalorder %v64, %v82
    %vm101 = vcmp.eq.s32.totalorder %v64, %v85
    %vm102 = vcmp.eq.s32.totalorder %v64, %v88
    %vm103 = vcmp.eq.s32.totalorder %v64, %v91
    %vm104 = vcmp.eq.s32.totalorder %v64, %v94
    %v105 = vsel %vm95, 1, 0
    %v106 = vsel %vm96, 1, 0
    %v107 = vsel %vm97, 1, 0
    %v108 = vsel %vm98, 1, 0
    %v109 = vsel %vm99, 1, 0
    %v110 = vsel %vm100, 1, 0
    %v111 = vsel %vm101, 1, 0
    %v112 = vsel %vm102, 1, 0
    %v113 = vsel %vm103, 1, 0
    %v114 = vsel %vm104, 1, 0
    %v115 = vcvt.s32.f32 %v105
    %v116 = vcvt.s32.f32 %v106
    %v117 = vcvt.s32.f32 %v107
    %v118 = vcvt.s32.f32 %v108
    %v119 = vcvt.s32.f32 %v109
    %v120 = vcvt.s32.f32 %v110
    %v121 = vcvt.s32.f32 %v111
    %v122 = vcvt.s32.f32 %v112
    %v123 = vcvt.s32.f32 %v113
    %v124 = vcvt.s32.f32 %v114
    %v125 = vld [vmem:[#allocation3] sm:$0xff]
    %v126 = vld [vmem:[#allocation3 + $0x8] sm:$0xff]
    %v127 = vld [vmem:[#allocation3 + $0x10] sm:$0xff]
    %v128 = vld [vmem:[#allocation3 + $0x18] sm:$0xff]
    %v129 = vld [vmem:[#allocation3 + $0x20] sm:$0xff]
    %v130 = vld [vmem:[#allocation3 + $0x28] sm:$0xff]
    %v131 = vld [vmem:[#allocation3 + $0x30] sm:$0xff]
    %v132 = vld [vmem:[#allocation3 + $0x38] sm:$0xff]
    %v133 = vld [vmem:[#allocation3 + $0x40] sm:$0xff]
    %v134 = vld [vmem:[#allocation3 + $0x48] sm:$0xff]
    %v135 = vld [vmem:[#allocation3 + $0x50] sm:$0xff]
    %v136 = vld [vmem:[#allocation3 + $0x58] sm:$0xff]
    %v137 = vld [vmem:[#allocation3 + $0x60] sm:$0xff]
    %v138 = vld [vmem:[#allocation3 + $0x68] sm:$0xff]
    %v139 = vld [vmem:[#allocation3 + $0x70] sm:$0xff]
    %v140 = vld [vmem:[#allocation3 + $0x78] sm:$0xff]
    %141 = vmatpush.msra.mxu0 %v140
    %142 = vmatpush.msra.mxu0 %v139
    %143 = vmatpush.msra.mxu0 %v138
    %144 = vmatpush.msra.mxu0 %v137
    %145 = vmatpush.msra.mxu0 %v136
    %146 = vmatpush.msra.mxu0 %v135
    %147 = vmatpush.msra.mxu0 %v134
    %148 = vmatpush.msra.mxu0 %v133
    %149 = vmatpush.msra.mxu0 %v132
    %150 = vmatpush.msra.mxu0 %v131
    %151 = vmatpush.msra.mxu0 %v130
    %152 = vmatpush.msra.mxu0 %v129
    %153 = vmatpush.msra.mxu0 %v128
    %154 = vmatpush.msra.mxu0 %v127
    %155 = vmatpush.msra.mxu0 %v126
    %156 = vmatpush.msra.mxu0 %v125
    %157 = vmatmul.f32.gmra.mxu0 %v115
    %v158 = vpop.f32.mrf.mxu0
    %v159 = vadd.f32 0.0, %v158
    %160 = vmatmul.f32.gmra.mxu0 %v116
    %v161 = vpop.f32.mrf.mxu0
    %v162 = vadd.f32 0.0, %v161
    %163 = vmatmul.f32.gmra.mxu0 %v117
    %v164 = vpop.f32.mrf.mxu0
    %v165 = vadd.f32 0.0, %v164
    %166 = vmatmul.f32.gmra.mxu0 %v118
    %v167 = vpop.f32.mrf.mxu0
    %v168 = vadd.f32 0.0, %v167
    %169 = vmatmul.f32.gmra.mxu0 %v119
    %v170 = vpop.f32.mrf.mxu0
    %v171 = vadd.f32 0.0, %v170
    %172 = vmatmul.f32.gmra.mxu0 %v120
    %v173 = vpop.f32.mrf.mxu0
    %v174 = vadd.f32 0.0, %v173
    %175 = vmatmul.f32.gmra.mxu0 %v121
    %v176 = vpop.f32.mrf.mxu0
    %v177 = vadd.f32 0.0, %v176
    %178 = vmatmul.f32.gmra.mxu0 %v122
    %v179 = vpop.f32.mrf.mxu0
    %v180 = vadd.f32 0.0, %v179
    %181 = vmatmul.f32.gmra.mxu0 %v123
    %v182 = vpop.f32.mrf.mxu0
    %v183 = vadd.f32 0.0, %v182
    %184 = vmatmul.f32.gmra.mxu0 %v124
    %v185 = vpop.f32.mrf.mxu0
    %v186 = vadd.f32 0.0, %v185
    %187 = vdwg.mxu0
    %v188 = vld [vmem:[#allocation5] sm:$0xff]
    %v189 = vld [vmem:[#allocation5 + $0x8] sm:$0xff]
    %v190 = vld [vmem:[#allocation5 + $0x10] sm:$0xff]
    %v191 = vld [vmem:[#allocation5 + $0x18] sm:$0xff]
    %v192 = vld [vmem:[#allocation5 + $0x20] sm:$0xff]
    %v193 = vld [vmem:[#allocation5 + $0x28] sm:$0xff]
    %v194 = vld [vmem:[#allocation5 + $0x30] sm:$0xff]
    %v195 = vld [vmem:[#allocation5 + $0x38] sm:$0xff]
    %v196 = vld [vmem:[#allocation5 + $0x40] sm:$0xff]
    %v197 = vld [vmem:[#allocation5 + $0x48] sm:$0xff]
    %v198 = vld [vmem:[#allocation5 + $0x50] sm:$0xff]
    %v199 = vld [vmem:[#allocation5 + $0x58] sm:$0xff]
    %v200 = vld [vmem:[#allocation5 + $0x60] sm:$0xff]
    %v201 = vld [vmem:[#allocation5 + $0x68] sm:$0xff]
    %v202 = vld [vmem:[#allocation5 + $0x70] sm:$0xff]
    %v203 = vld [vmem:[#allocation5 + $0x78] sm:$0xff]
    %204 = vmatpush.msra.mxu0 %v203
    %205 = vmatpush.msra.mxu0 %v202
    %206 = vmatpush.msra.mxu0 %v201
    %207 = vmatpush.msra.mxu0 %v200
    %208 = vmatpush.msra.mxu0 %v199
    %209 = vmatpush.msra.mxu0 %v198
    %210 = vmatpush.msra.mxu0 %v197
    %211 = vmatpush.msra.mxu0 %v196
    %212 = vmatpush.msra.mxu0 %v195
    %213 = vmatpush.msra.mxu0 %v194
    %214 = vmatpush.msra.mxu0 %v193
    %215 = vmatpush.msra.mxu0 %v192
    %216 = vmatpush.msra.mxu0 %v191
    %217 = vmatpush.msra.mxu0 %v190
    %218 = vmatpush.msra.mxu0 %v189
    %219 = vmatpush.msra.mxu0 %v188
    %220 = vmatmul.f32.gmra.mxu0 0.0
    %v221 = vpop.f32.mrf.mxu0
    %v222 = vadd.f32 %v159, %v221
    %223 = vdwg.mxu0
    %v224 = vtanh.pop %v222
    %225 = vmatpush.msra.mxu0 %v203
    %226 = vmatpush.msra.mxu0 %v202
    %227 = vmatpush.msra.mxu0 %v201
    %228 = vmatpush.msra.mxu0 %v200
    %229 = vmatpush.msra.mxu0 %v199
    %230 = vmatpush.msra.mxu0 %v198
    %231 = vmatpush.msra.mxu0 %v197
    %232 = vmatpush.msra.mxu0 %v196
    %233 = vmatpush.msra.mxu0 %v195
    %234 = vmatpush.msra.mxu0 %v194
    %235 = vmatpush.msra.mxu0 %v193
    %236 = vmatpush.msra.mxu0 %v192
    %237 = vmatpush.msra.mxu0 %v191
    %238 = vmatpush.msra.mxu0 %v190
    %239 = vmatpush.msra.mxu0 %v189
    %240 = vmatpush.msra.mxu0 %v188
    %241 = vmatmul.f32.gmra.mxu0 %v224
    %v242 = vpop.f32.mrf.mxu0
    %v243 = vadd.f32 %v162, %v242
    %244 = vdwg.mxu0
    %v245 = vtanh.pop %v243
    %246 = vmatpush.msra.mxu0 %v203
    %247 = vmatpush.msra.mxu0 %v202
    %248 = vmatpush.msra.mxu0 %v201
    %249 = vmatpush.msra.mxu0 %v200
    %250 = vmatpush.msra.mxu0 %v199
    %251 = vmatpush.msra.mxu0 %v198
    %252 = vmatpush.msra.mxu0 %v197
    %253 = vmatpush.msra.mxu0 %v196
    %254 = vmatpush.msra.mxu0 %v195
    %255 = vmatpush.msra.mxu0 %v194
    %256 = vmatpush.msra.mxu0 %v193
    %257 = vmatpush.msra.mxu0 %v192
    %258 = vmatpush.msra.mxu0 %v191
    %259 = vmatpush.msra.mxu0 %v190
    %260 = vmatpush.msra.mxu0 %v189
    %261 = vmatpush.msra.mxu0 %v188
    %262 = vmatmul.f32.gmra.mxu0 %v245
    %v263 = vpop.f32.mrf.mxu0
    %v264 = vadd.f32 %v165, %v263
    %265 = vdwg.mxu0
    %v266 = vtanh.pop %v264
    %267 = vmatpush.msra.mxu0 %v203
    %268 = vmatpush.msra.mxu0 %v202
    %269 = vmatpush.msra.mxu0 %v201
    %270 = vmatpush.msra.mxu0 %v200
    %271 = vmatpush.msra.mxu0 %v199
    %272 = vmatpush.msra.mxu0 %v198
    %273 = vmatpush.msra.mxu0 %v197
    %274 = vmatpush.msra.mxu0 %v196
    %275 = vmatpush.msra.mxu0 %v195
    %276 = vmatpush.msra.mxu0 %v194
    %277 = vmatpush.msra.mxu0 %v193
    %278 = vmatpush.msra.mxu0 %v192
    %279 = vmatpush.msra.mxu0 %v191
    %280 = vmatpush.msra.mxu0 %v190
    %281 = vmatpush.msra.mxu0 %v189
    %282 = vmatpush.msra.mxu0 %v188
    %283 = vmatmul.f32.gmra.mxu0 %v266
    %v284 = vpop.f32.mrf.mxu0
    %v285 = vadd.f32 %v168, %v284
    %286 = vdwg.mxu0
    %v287 = vtanh.pop %v285
    %288 = vmatpush.msra.mxu0 %v203
    %289 = vmatpush.msra.mxu0 %v202
    %290 = vmatpush.msra.mxu0 %v201
    %291 = vmatpush.msra.mxu0 %v200
    %292 = vmatpush.msra.mxu0 %v199
    %293 = vmatpush.msra.mxu0 %v198
    %294 = vmatpush.msra.mxu0 %v197
    %295 = vmatpush.msra.mxu0 %v196
    %296 = vmatpush.msra.mxu0 %v195
    %297 = vmatpush.msra.mxu0 %v194
    %298 = vmatpush.msra.mxu0 %v193
    %299 = vmatpush.msra.mxu0 %v192
    %300 = vmatpush.msra.mxu0 %v191
    %301 = vmatpush.msra.mxu0 %v190
    %302 = vmatpush.msra.mxu0 %v189
    %303 = vmatpush.msra.mxu0 %v188
    %304 = vmatmul.f32.gmra.mxu0 %v287
    %v305 = vpop.f32.mrf.mxu0
    %v306 = vadd.f32 %v171, %v305
    %307 = vdwg.mxu0
    %v308 = vtanh.pop %v306
    %309 = vmatpush.msra.mxu0 %v203
    %310 = vmatpush.msra.mxu0 %v202
    %311 = vmatpush.msra.mxu0 %v201
    %312 = vmatpush.msra.mxu0 %v200
    %313 = vmatpush.msra.mxu0 %v199
    %314 = vmatpush.msra.mxu0 %v198
    %315 = vmatpush.msra.mxu0 %v197
    %316 = vmatpush.msra.mxu0 %v196
    %317 = vmatpush.msra.mxu0 %v195
    %318 = vmatpush.msra.mxu0 %v194
    %319 = vmatpush.msra.mxu0 %v193
    %320 = vmatpush.msra.mxu0 %v192
    %321 = vmatpush.msra.mxu0 %v191
    %322 = vmatpush.msra.mxu0 %v190
    %323 = vmatpush.msra.mxu0 %v189
    %324 = vmatpush.msra.mxu0 %v188
    %325 = vmatmul.f32.gmra.mxu0 %v308
    %v326 = vpop.f32.mrf.mxu0
    %v327 = vadd.f32 %v174, %v326
    %328 = vdwg.mxu0
    %v329 = vtanh.pop %v327
    %330 = vmatpush.msra.mxu0 %v203
    %331 = vmatpush.msra.mxu0 %v202
    %332 = vmatpush.msra.mxu0 %v201
    %333 = vmatpush.msra.mxu0 %v200
    %334 = vmatpush.msra.mxu0 %v199
    %335 = vmatpush.msra.mxu0 %v198
    %336 = vmatpush.msra.mxu0 %v197
    %337 = vmatpush.msra.mxu0 %v196
    %338 = vmatpush.msra.mxu0 %v195
    %339 = vmatpush.msra.mxu0 %v194
    %340 = vmatpush.msra.mxu0 %v193
    %341 = vmatpush.msra.mxu0 %v192
    %342 = vmatpush.msra.mxu0 %v191
    %343 = vmatpush.msra.mxu0 %v190
    %344 = vmatpush.msra.mxu0 %v189
    %345 = vmatpush.msra.mxu0 %v188
    %346 = vmatmul.f32.gmra.mxu0 %v329
    %v347 = vpop.f32.mrf.mxu0
    %v348 = vadd.f32 %v177, %v347
    %349 = vdwg.mxu0
    %v350 = vtanh.pop %v348
    %351 = vmatpush.msra.mxu0 %v203
    %352 = vmatpush.msra.mxu0 %v202
    %353 = vmatpush.msra.mxu0 %v201
    %354 = vmatpush.msra.mxu0 %v200
    %355 = vmatpush.msra.mxu0 %v199
    %356 = vmatpush.msra.mxu0 %v198
    %357 = vmatpush.msra.mxu0 %v197
    %358 = vmatpush.msra.mxu0 %v196
    %359 = vmatpush.msra.mxu0 %v195
    %360 = vmatpush.msra.mxu0 %v194
    %361 = vmatpush.msra.mxu0 %v193
    %362 = vmatpush.msra.mxu0 %v192
    %363 = vmatpush.msra.mxu0 %v191
    %364 = vmatpush.msra.mxu0 %v190
    %365 = vmatpush.msra.mxu0 %v189
    %366 = vmatpush.msra.mxu0 %v188
    %367 = vmatmul.f32.gmra.mxu0 %v350
    %v368 = vpop.f32.mrf.mxu0
    %v369 = vadd.f32 %v180, %v368
    %370 = vdwg.mxu0
    %v371 = vtanh.pop %v369
    %372 = vmatpush.msra.mxu0 %v203
    %373 = vmatpush.msra.mxu0 %v202
    %374 = vmatpush.msra.mxu0 %v201
    %375 = vmatpush.msra.mxu0 %v200
    %376 = vmatpush.msra.mxu0 %v199
    %377 = vmatpush.msra.mxu0 %v198
    %378 = vmatpush.msra.mxu0 %v197
    %379 = vmatpush.msra.mxu0 %v196
    %380 = vmatpush.msra.mxu0 %v195
    %381 = vmatpush.msra.mxu0 %v194
    %382 = vmatpush.msra.mxu0 %v193
    %383 = vmatpush.msra.mxu0 %v192
    %384 = vmatpush.msra.mxu0 %v191
    %385 = vmatpush.msra.mxu0 %v190
    %386 = vmatpush.msra.mxu0 %v189
    %387 = vmatpush.msra.mxu0 %v188
    %388 = vmatmul.f32.gmra.mxu0 %v371
    %v389 = vpop.f32.mrf.mxu0
    %v390 = vadd.f32 %v183, %v389
    %391 = vdwg.mxu0
    %v392 = vtanh.pop %v390
    %393 = vmatpush.msra.mxu0 %v203
    %394 = vmatpush.msra.mxu0 %v202
    %395 = vmatpush.msra.mxu0 %v201
    %396 = vmatpush.msra.mxu0 %v200
    %397 = vmatpush.msra.mxu0 %v199
    %398 = vmatpush.msra.mxu0 %v198
    %399 = vmatpush.msra.mxu0 %v197
    %400 = vmatpush.msra.mxu0 %v196
    %401 = vmatpush.msra.mxu0 %v195
    %402 = vmatpush.msra.mxu0 %v194
    %403 = vmatpush.msra.mxu0 %v193
    %404 = vmatpush.msra.mxu0 %v192
    %405 = vmatpush.msra.mxu0 %v191
    %406 = vmatpush.msra.mxu0 %v190
    %407 = vmatpush.msra.mxu0 %v189
    %408 = vmatpush.msra.mxu0 %v188
    %409 = vmatmul.f32.gmra.mxu0 %v392
    %v410 = vpop.f32.mrf.mxu0
    %v411 = vadd.f32 %v186, %v410
    %412 = vdwg.mxu0
    %v413 = vtanh.pop %v411
    %v414 = vld [vmem:[%s3] sm:$0x1]
    %v416 = vperm.slane %v414, 0
    %v418 = vmul.f32 %v413, %v416
    %419 = vadd.xlane.f32.xlu0 %v418
    %v420 = vpop.xlane.xlu0 %419
    %s421 = sld [smem:[#allocation2]]
    %v422 = vstv %s421
    %v423 = vadd.f32 %v420, %v422
    %v424 = vmul.f32 %v423, 0.5
    %v425 = vtanh.pop %v424
    %v426 = vmul.f32 %v425, 0.5
    %v427 = vadd.f32 %v426, 0.5
    %428 = vst [vmem:[%s5] sm:$0xff] %v427
    // Predicated region
    $region30: #{_rnn_forward.1} parent=1 // pred_check
      _
    $region31: #{_rnn_forward.1} parent=1 // pred_check_branch
      %430 = sbr.rel (0) target = $region33
    $region32: #{_rnn_forward.1} parent=1 // pred_region
      _
    $region33: #{_rnn_forward.1} parent=1 // pred_fallthru
      _
    // Predicated region
    $region34: #{_rnn_forward.1} parent=1 // pred_check
      _
    $region35: #{_rnn_forward.1} parent=1 // pred_check_branch
      %432 = sbr.rel (0) target = $region37
    $region36: #{_rnn_forward.1} parent=1 // pred_region
      _
    $region37: #{_rnn_forward.1} parent=1 // pred_fallthru
      _
    %433 = vsyncpa [#allocation4], 1
    %434 = vsyncpa [#allocation6], 1

</llo_original>
